<compile_context>
chip_gen: v5e
topology: v5e:2x2
jax: 0.10.0
libtpu: 0.0.40
codegen_flags: <defaults>
</compile_context>

<pallas_src>
import functools

import jax
import jax.numpy as jnp
import numpy as np
from jax.experimental import pallas as pl
from jax.experimental.pallas import tpu as pltpu

_OUT_LANES = 128  # lane-dense output slab width (sliced to 3 in the wrapper)


def _head_kernel(x_ref, w_ref, b_ref, out_ref, *, num_prompts,
                 pos_prompt_indexes, neg_prompt_indexes, out_width):
    # x_ref:   (RB, P, H)        hidden states for RB reviews' P prompts each
    # w_ref:   (H, C)            synthetic NLI classifier weight
    # b_ref:   (1, C)  f32       synthetic NLI classifier bias
    # out_ref: (RB, out_width)   [pos, neg, neu, 0...] per review (lane-dense)
    rb = x_ref.shape[0]
    c = w_ref.shape[1]

    w = w_ref[...]
    b = b_ref[...]  # (1, C) f32

    # Multiplicity-aware static prompt membership (matches torch fancy-index
    # gather semantics even with repeated indexes).
    pos_counts = {}
    for idx in pos_prompt_indexes:
        pos_counts[idx] = pos_counts.get(idx, 0) + 1
    neg_counts = {}
    for idx in neg_prompt_indexes:
        neg_counts[idx] = neg_counts.get(idx, 0) + 1

    pos_acc = jnp.zeros((rb, c), jnp.float32)
    neg_acc = jnp.zeros((rb, c), jnp.float32)
    min_acc = jnp.full((rb, c), jnp.inf, dtype=jnp.float32)

    # Static loop over the (small) number of prompts; each dot has M = RB rows.
    # Bias is NOT added here: mean/min commute with the constant bias, so it is
    # applied once after the reductions (saves P VPU adds per tile).
    for i in range(num_prompts):
        xi = x_ref[:, i, :]                                           # (RB, H)
        li = jnp.dot(xi, w, preferred_element_type=jnp.float32)       # (RB, C)
        pc = pos_counts.get(i, 0)
        if pc:
            pos_acc = pos_acc + (li if pc == 1 else float(pc) * li)
        nc = neg_counts.get(i, 0)
        if nc:
            neg_acc = neg_acc + (li if nc == 1 else float(nc) * li)
        min_acc = jnp.minimum(min_acc, li)

    inv_pos = 1.0 / float(len(pos_prompt_indexes))
    inv_neg = 1.0 / float(len(neg_prompt_indexes))
    pos = pos_acc[:, 1:2] * inv_pos + b[:, 1:2]                       # (RB, 1)
    neg = neg_acc[:, 1:2] * inv_neg + b[:, 1:2]                       # (RB, 1)
    neu = min_acc[:, 2:3] + b[:, 2:3]                                 # (RB, 1)

    pad = jnp.zeros((rb, out_width - 3), jnp.float32)
    out_ref[...] = jnp.concatenate([pos, neg, neu, pad],
                                   axis=1).astype(out_ref.dtype)


def _pick_review_block(num_reviews, num_prompts, hidden, itemsize,
                       target_bytes=4 << 20):
    """Largest RB dividing R with RB a multiple of 8 and x tile <= target."""
    sub = 8 if itemsize >= 4 else 16
    padded_p = ((num_prompts + sub - 1) // sub) * sub   # VMEM sublane padding
    review_bytes = padded_p * hidden * itemsize
    candidates = [rb for rb in range(8, num_reviews + 1, 8)
                  if num_reviews % rb == 0]
    candidates.append(num_reviews)  # full extent is always a legal block
    fitting = [rb for rb in candidates if rb * review_bytes <= target_bytes]
    return max(fitting) if fitting else min(candidates)


def nli_min_sentiment_head(x, w, b, *, num_prompts, pos_prompt_indexes,
                           neg_prompt_indexes, review_block=None):
    """x: (R*P, H) hidden states; w: (H, C); b: (C,). Returns (R, 3) f32."""
    N, H = x.shape
    P = num_prompts
    assert N % P == 0, "rows must be a multiple of num_prompts"
    R = N // P
    C = w.shape[1]
    assert C >= 3
    assert len(pos_prompt_indexes) > 0 and len(neg_prompt_indexes) > 0
    assert all(0 <= i < P for i in pos_prompt_indexes)
    assert all(0 <= i < P for i in neg_prompt_indexes)

    itemsize = jnp.dtype(x.dtype).itemsize
    RB = (review_block if review_block is not None
          else _pick_review_block(R, P, H, itemsize))
    assert R % RB == 0, "review_block must divide the number of reviews"
    grid = (R // RB,)

    x3 = x.reshape(R, P, H)
    b2 = b.reshape(1, C).astype(jnp.float32)

    # VMEM budget: double-buffered x tile (with sublane padding headroom),
    # double-buffered output tile, weights, bias, slack.
    sub = 8 if itemsize >= 4 else 16
    padded_p = ((P + sub - 1) // sub) * sub
    x_tile = RB * padded_p * H * itemsize
    out_tile = RB * _OUT_LANES * 4
    need = 2 * x_tile + 2 * out_tile + H * C * jnp.dtype(w.dtype).itemsize \
        + 4 * C + (1 << 20)
    vmem_limit = int(min(max(need, 16 << 20), 64 << 20))

    kernel = functools.partial(
        _head_kernel,
        num_prompts=P,
        pos_prompt_indexes=tuple(int(i) for i in pos_prompt_indexes),
        neg_prompt_indexes=tuple(int(i) for i in neg_prompt_indexes),
        out_width=_OUT_LANES,
    )

    out = pl.pallas_call(
        kernel,
        out_shape=jax.ShapeDtypeStruct((R, _OUT_LANES), jnp.float32),
        grid=grid,
        in_specs=[
            pl.BlockSpec((RB, P, H), lambda i: (i, 0, 0)),  # RB reviews' prompts
            pl.BlockSpec((H, C), lambda i: (0, 0)),          # classifier weight
            pl.BlockSpec((1, C), lambda i: (0, 0)),          # classifier bias
        ],
        out_specs=pl.BlockSpec((RB, _OUT_LANES), lambda i: (i, 0)),
        compiler_params=pltpu.CompilerParams(
            dimension_semantics=("parallel",),
            vmem_limit_bytes=vmem_limit),
    )(x3, w, b2)
    return out[:, :3]


def _reference(x, w, b, *, num_prompts, pos_prompt_indexes, neg_prompt_indexes):
    """Pure-JAX reference mirroring the torch forward (f32 compute)."""
    logits = x.astype(jnp.float32) @ w.astype(jnp.float32) + b.astype(jnp.float32)
    R = x.shape[0] // num_prompts
    lg = logits.reshape(R, num_prompts, -1)
    pos = jnp.mean(lg[:, jnp.asarray(pos_prompt_indexes), 1], axis=1)
    neg = jnp.mean(lg[:, jnp.asarray(neg_prompt_indexes), 1], axis=1)
    neu = jnp.min(lg[:, :, 2], axis=1)
    return jnp.stack([pos, neg, neu], axis=1)


if __name__ == "__main__":
    # Small deterministic example:
    #   R = 16 reviews, P = 4 prompts each, H = 32 hidden dims, C = 3 classes
    #   RB = 8 reviews per grid step -> grid = (2,)
    R, P, H, C = 16, 4, 32, 3
    RB = 8
    num_prompts = P
    pos_prompt_indexes = (0, 1)
    neg_prompt_indexes = (2, 3)

    key = jax.random.PRNGKey(0)
    kx, kw, kb = jax.random.split(key, 3)
    # bf16 HBM inputs (bandwidth-friendly); accumulation/reductions stay f32.
    x = jax.random.normal(kx, (R * P, H), dtype=jnp.float32).astype(jnp.bfloat16)
    w = (jax.random.normal(kw, (H, C), dtype=jnp.float32) * 0.1).astype(jnp.bfloat16)
    b = jax.random.normal(kb, (C,), dtype=jnp.float32) * 0.1

    out = nli_min_sentiment_head(
        x, w, b,
        num_prompts=num_prompts,
        pos_prompt_indexes=pos_prompt_indexes,
        neg_prompt_indexes=neg_prompt_indexes,
        review_block=RB,
    )
    out = jax.block_until_ready(out)

    ref = _reference(
        x, w, b,
        num_prompts=num_prompts,
        pos_prompt_indexes=pos_prompt_indexes,
        neg_prompt_indexes=neg_prompt_indexes,
    )
    np.testing.assert_allclose(np.asarray(out), np.asarray(ref),
                               rtol=1e-3, atol=1e-3)
    print("KERNEL_OK")
</pallas_src>

<mosaic_0001>
module attributes {stable_mosaic.version = 11 : i64} {
  func.func @_head_kernel(%arg0: i32, %arg1: memref<8x4x32xbf16, #tpu.memory_space<vmem>>, %arg2: memref<32x3xbf16, #tpu.memory_space<vmem>>, %arg3: memref<1x3xf32, #tpu.memory_space<vmem>>, %arg4: memref<8x128xf32, #tpu.memory_space<vmem>>) attributes {dimension_semantics = [#tpu.dimension_semantics<parallel>], iteration_bounds = array<i64: 2>, scalar_prefetch = 0 : i64, scratch_operands = 0 : i64, tpu.core_type = #tpu.core_type<tc>, window_params = [{transform_indices = @transform_0, window_bounds = array<i64: 8, 4, 32>}, {pipeline_mode = #tpu.pipeline_mode<synchronous>, transform_indices = @transform_1, window_bounds = array<i64: 32, 3>}, {pipeline_mode = #tpu.pipeline_mode<synchronous>, transform_indices = @transform_2, window_bounds = array<i64: 1, 3>}, {transform_indices = @transform_3, window_bounds = array<i64: 8, 128>}]} {
    %c0 = arith.constant 0 : index
    %c0_0 = arith.constant 0 : index
    %0 = vector.load %arg2[%c0, %c0_0] : memref<32x3xbf16, #tpu.memory_space<vmem>>, vector<32x3xbf16>
    %c0_1 = arith.constant 0 : index
    %c0_2 = arith.constant 0 : index
    %1 = vector.load %arg3[%c0_1, %c0_2] : memref<1x3xf32, #tpu.memory_space<vmem>>, vector<1x3xf32>
    %cst = arith.constant 0.000000e+00 : f32
    %2 = vector.broadcast %cst : f32 to vector<8x3xf32>
    %cst_3 = arith.constant 0.000000e+00 : f32
    %3 = vector.broadcast %cst_3 : f32 to vector<8x3xf32>
    %cst_4 = arith.constant 0x7F800000 : f32
    %4 = vector.broadcast %cst_4 : f32 to vector<8x3xf32>
    %c0_5 = arith.constant 0 : index
    %c0_6 = arith.constant 0 : index
    %c0_7 = arith.constant 0 : index
    %5 = vector.load %arg1[%c0_5, %c0_6, %c0_7] : memref<8x4x32xbf16, #tpu.memory_space<vmem>>, vector<8x1x32xbf16>
    %6 = vector.shape_cast %5 : vector<8x1x32xbf16> to vector<8x32xbf16>
    %cst_8 = arith.constant dense<0.000000e+00> : vector<8x3xf32>
    %7 = tpu.matmul %6, %0, %cst_8 {dimension_numbers = #tpu.dot_dimension_numbers<[1], [0], [0], [1], [0, 0, 1, 1], [], []>} : vector<8x32xbf16>, vector<32x3xbf16>, vector<8x3xf32> -> vector<8x3xf32>
    %8 = arith.addf %2, %7 : vector<8x3xf32>
    %9 = arith.minimumf %4, %7 : vector<8x3xf32>
    %c0_9 = arith.constant 0 : index
    %c1 = arith.constant 1 : index
    %c0_10 = arith.constant 0 : index
    %10 = vector.load %arg1[%c0_9, %c1, %c0_10] : memref<8x4x32xbf16, #tpu.memory_space<vmem>>, vector<8x1x32xbf16>
    %11 = vector.shape_cast %10 : vector<8x1x32xbf16> to vector<8x32xbf16>
    %cst_11 = arith.constant dense<0.000000e+00> : vector<8x3xf32>
    %12 = tpu.matmul %11, %0, %cst_11 {dimension_numbers = #tpu.dot_dimension_numbers<[1], [0], [0], [1], [0, 0, 1, 1], [], []>} : vector<8x32xbf16>, vector<32x3xbf16>, vector<8x3xf32> -> vector<8x3xf32>
    %13 = arith.addf %8, %12 : vector<8x3xf32>
    %14 = arith.minimumf %9, %12 : vector<8x3xf32>
    %c0_12 = arith.constant 0 : index
    %c2 = arith.constant 2 : index
    %c0_13 = arith.constant 0 : index
    %15 = vector.load %arg1[%c0_12, %c2, %c0_13] : memref<8x4x32xbf16, #tpu.memory_space<vmem>>, vector<8x1x32xbf16>
    %16 = vector.shape_cast %15 : vector<8x1x32xbf16> to vector<8x32xbf16>
    %cst_14 = arith.constant dense<0.000000e+00> : vector<8x3xf32>
    %17 = tpu.matmul %16, %0, %cst_14 {dimension_numbers = #tpu.dot_dimension_numbers<[1], [0], [0], [1], [0, 0, 1, 1], [], []>} : vector<8x32xbf16>, vector<32x3xbf16>, vector<8x3xf32> -> vector<8x3xf32>
    %18 = arith.addf %3, %17 : vector<8x3xf32>
    %19 = arith.minimumf %14, %17 : vector<8x3xf32>
    %c0_15 = arith.constant 0 : index
    %c3 = arith.constant 3 : index
    %c0_16 = arith.constant 0 : index
    %20 = vector.load %arg1[%c0_15, %c3, %c0_16] : memref<8x4x32xbf16, #tpu.memory_space<vmem>>, vector<8x1x32xbf16>
    %21 = vector.shape_cast %20 : vector<8x1x32xbf16> to vector<8x32xbf16>
    %cst_17 = arith.constant dense<0.000000e+00> : vector<8x3xf32>
    %22 = tpu.matmul %21, %0, %cst_17 {dimension_numbers = #tpu.dot_dimension_numbers<[1], [0], [0], [1], [0, 0, 1, 1], [], []>} : vector<8x32xbf16>, vector<32x3xbf16>, vector<8x3xf32> -> vector<8x3xf32>
    %23 = arith.addf %18, %22 : vector<8x3xf32>
    %24 = arith.minimumf %19, %22 : vector<8x3xf32>
    %25 = vector.extract_strided_slice %13 {offsets = [0, 1], sizes = [8, 1], strides = [1, 1]} : vector<8x3xf32> to vector<8x1xf32>
    %cst_18 = arith.constant 5.000000e-01 : f32
    %26 = vector.broadcast %cst_18 : f32 to vector<8x1xf32>
    %27 = arith.mulf %25, %26 : vector<8x1xf32>
    %28 = vector.extract_strided_slice %1 {offsets = [0, 1], sizes = [1, 1], strides = [1, 1]} : vector<1x3xf32> to vector<1x1xf32>
    %29 = vector.broadcast %28 : vector<1x1xf32> to vector<8x1xf32>
    %30 = arith.addf %27, %29 : vector<8x1xf32>
    %31 = vector.extract_strided_slice %23 {offsets = [0, 1], sizes = [8, 1], strides = [1, 1]} : vector<8x3xf32> to vector<8x1xf32>
    %cst_19 = arith.constant 5.000000e-01 : f32
    %32 = vector.broadcast %cst_19 : f32 to vector<8x1xf32>
    %33 = arith.mulf %31, %32 : vector<8x1xf32>
    %34 = vector.extract_strided_slice %1 {offsets = [0, 1], sizes = [1, 1], strides = [1, 1]} : vector<1x3xf32> to vector<1x1xf32>
    %35 = vector.broadcast %34 : vector<1x1xf32> to vector<8x1xf32>
    %36 = arith.addf %33, %35 : vector<8x1xf32>
    %37 = vector.extract_strided_slice %24 {offsets = [0, 2], sizes = [8, 1], strides = [1, 1]} : vector<8x3xf32> to vector<8x1xf32>
    %38 = vector.extract_strided_slice %1 {offsets = [0, 2], sizes = [1, 1], strides = [1, 1]} : vector<1x3xf32> to vector<1x1xf32>
    %39 = vector.broadcast %38 : vector<1x1xf32> to vector<8x1xf32>
    %40 = arith.addf %37, %39 : vector<8x1xf32>
    %cst_20 = arith.constant 0.000000e+00 : f32
    %41 = vector.broadcast %cst_20 : f32 to vector<8x125xf32>
    %42 = tpu.concatenate %30, %36, %40, %41 in 1 : vector<8x1xf32>, vector<8x1xf32>, vector<8x1xf32>, vector<8x125xf32> -> vector<8x128xf32>
    %c0_21 = arith.constant 0 : index
    %c0_22 = arith.constant 0 : index
    %43 = vector.load %arg4[%c0_21, %c0_22] : memref<8x128xf32, #tpu.memory_space<vmem>>, vector<8x128xf32>
    tpu.vector_store %arg4[%c0_21, %c0_22], %42 {strides = array<i32>} : memref<8x128xf32, #tpu.memory_space<vmem>>, vector<8x128xf32>,
    return
  }
  func.func @transform_0(%arg0: i32) -> (i32, i32, i32) {
    %c0_i32 = arith.constant 0 : i32
    %c0_i32_0 = arith.constant 0 : i32
    %c0_i32_1 = arith.constant 0 : i32
    return %arg0, %c0_i32, %c0_i32_0 : i32, i32, i32
  }
  func.func @transform_1(%arg0: i32) -> (i32, i32) {
    %c0_i32 = arith.constant 0 : i32
    %c0_i32_0 = arith.constant 0 : i32
    %c0_i32_1 = arith.constant 0 : i32
    return %c0_i32, %c0_i32_0 : i32, i32
  }
  func.func @transform_2(%arg0: i32) -> (i32, i32) {
    %c0_i32 = arith.constant 0 : i32
    %c0_i32_0 = arith.constant 0 : i32
    %c0_i32_1 = arith.constant 0 : i32
    return %c0_i32, %c0_i32_0 : i32, i32
  }
  func.func @transform_3(%arg0: i32) -> (i32, i32) {
    %c0_i32 = arith.constant 0 : i32
    %c0_i32_0 = arith.constant 0 : i32
    return %arg0, %c0_i32 : i32, i32
  }
}

</mosaic_0001>

<llo_original>
// kernel: tpu_custom_call.1
$region0: #{tpu_custom_call.1}
  #allocation0 [shape = 'u32[]', space=smem, size = 0x4, offset = 0x4, fixed_abs, tag = 'smem constant byte address 0x4 - core index']
  #allocation1 [shape = 'u32[72,128]{1,0:T(1,128)}', space=vmem, size = 0x9000, scoped, tag = 'internal scratch']
  %s0 = inlined_call_operand.hbm [shape: bf16[16,4,32], index: 0, kind: input, shape index: {}]
  %s1 = inlined_call_operand.vmem [shape: bf16[32,3], index: 1, kind: input, shape index: {}]
  %s2 = inlined_call_operand.vmem [shape: f32[1,3], index: 2, kind: input, shape index: {}]
  %s3 = inlined_call_operand.hbm [shape: f32[16,128], index: 3, kind: output, shape index: {}]
  %s4 = sld [smem:[#allocation0]]
  $region49: #{tpu_custom_call.1} parent=0
    _
  %s6 = ssub.s32 1, %s4
  %s7 = scalar_select 0, %s6, %s4
  $region1: #{tpu_custom_call.1} parent=0
    #allocation2 [shape = 'u8[16384]{0}', space=vmem, size = 0x4000, scoped, tag = 'input window, operand 0']
    #allocation3 [shape = 's32[2]{0}', space=sflag, size = 0x8, scoped, tag = 'scoped memory for tpu_custom_call.1']
    #allocation4 [shape = 's32[2]{0}', space=sflag, size = 0x8, scoped, tag = 'scoped memory for tpu_custom_call.1']
    #allocation5 [shape = 'u8[8192]{0}', space=vmem, size = 0x2000, scoped, tag = 'output window, operand 0']
    %8 = vsyncpa [#allocation3], 0
    %s9 = scalar_lea.sflag [#allocation3], 1
    %10 = vsyncpa %s9, 0
    %11 = vsyncpa [#allocation4], 0
    %s12 = scalar_lea.sflag [#allocation4], 1
    %13 = vsyncpa %s12, 0
    loop: start=0, step=1, limit=4
    $region2: #{tpu_custom_call.1} parent=1 // loop_pre_header
      _
    $region3: #{tpu_custom_call.1} parent=1 // loop_header
      %s15 = sphi 0, %s19
      %p16 = scmp.ge.s32.totalorder %s15, 4
      %s25 = sphi 0, %s27
      %s28 = sphi 0, %s25
      %s29 = sphi 0, %s28
      %s45 = sphi 0, %s29
      %s49 = sphi 0, %s49
      %s51 = sphi 0, %s49
      %s52 = sphi 0, %s51
      %s66 = sphi 0, %s52
      %s70 = sphi 0, %s70
      %s72 = sphi 0, %s70
      %s73 = sphi 0, %s72
      %s87 = sphi 0, %s73
      %s93 = sphi 0, %s95
      %s96 = sphi 0, %s93
      %s97 = sphi 0, %s96
      %s113 = sphi 0, %s97
    $region4: #{tpu_custom_call.1} parent=1 // loop_header_branch
      %18 = sbr.rel (%p16) target = $region8
    $region5: #{tpu_custom_call.1} parent=1 // loop_body
      %s20 = ssub.s32 %s15, 1
      %s21 = ssub.s32 %s15, 2
      %s22 = sadd.s32 %s15, 1
      %s23 = ssub.s32 %s15, %s22
      %p24 = scmp.eq.s32.totalorder %s23, 0
      %s26 = sadd.s32 %s25, 1
      %s27 = scalar_select %p24, %s25, %s26
      %p30 = pneg %p24
      %p31 = scmp.eq.s32.totalorder %s15, 1
      %p32 = por %p30, %p31
      %p33 = scmp.ne.s32.totalorder %s25, %s28
      %p34 = scmp.eq.s32.totalorder %s15, 0
      %p35 = por %p33, %p34
      %p36 = scmp.ne.s32.totalorder %s25, %s28
      %p37 = scmp.eq.s32.totalorder %s20, 1
      %p38 = por %p36, %p37
      %p39 = scmp.ne.s32.totalorder %s28, %s29
      %p40 = scmp.eq.s32.totalorder %s20, 0
      %p41 = por %p39, %p40
      %p42 = scmp.ne.s32.totalorder %s28, %s29
      %p43 = scmp.eq.s32.totalorder %s21, 1
      %p44 = por %p42, %p43
      %p46 = scmp.ne.s32.totalorder %s29, %s45
      %p47 = scmp.eq.s32.totalorder %s21, 0
      %p48 = por %p46, %p47
      %s50 = sadd.s32 %s49, 1
      %p53 = scmp.eq.s32.totalorder %s15, 1
      %p54 = scmp.ne.s32.totalorder %s49, %s51
      %p55 = scmp.eq.s32.totalorder %s15, 0
      %p56 = por %p54, %p55
      %p57 = scmp.ne.s32.totalorder %s49, %s51
      %p58 = scmp.eq.s32.totalorder %s20, 1
      %p59 = por %p57, %p58
      %p60 = scmp.ne.s32.totalorder %s51, %s52
      %p61 = scmp.eq.s32.totalorder %s20, 0
      %p62 = por %p60, %p61
      %p63 = scmp.ne.s32.totalorder %s51, %s52
      %p64 = scmp.eq.s32.totalorder %s21, 1
      %p65 = por %p63, %p64
      %p67 = scmp.ne.s32.totalorder %s52, %s66
      %p68 = scmp.eq.s32.totalorder %s21, 0
      %p69 = por %p67, %p68
      %s71 = sadd.s32 %s70, 1
      %p74 = scmp.eq.s32.totalorder %s15, 1
      %p75 = scmp.ne.s32.totalorder %s70, %s72
      %p76 = scmp.eq.s32.totalorder %s15, 0
      %p77 = por %p75, %p76
      %p78 = scmp.ne.s32.totalorder %s70, %s72
      %p79 = scmp.eq.s32.totalorder %s20, 1
      %p80 = por %p78, %p79
      %p81 = scmp.ne.s32.totalorder %s72, %s73
      %p82 = scmp.eq.s32.totalorder %s20, 0
      %p83 = por %p81, %p82
      %p84 = scmp.ne.s32.totalorder %s72, %s73
      %p85 = scmp.eq.s32.totalorder %s21, 1
      %p86 = por %p84, %p85
      %p88 = scmp.ne.s32.totalorder %s73, %s87
      %p89 = scmp.eq.s32.totalorder %s21, 0
      %p90 = por %p88, %p89
      %s91 = ssub.s32 %s15, %s22
      %p92 = scmp.eq.s32.totalorder %s91, 0
      %s94 = sadd.s32 %s93, 1
      %s95 = scalar_select %p92, %s93, %s94
      %p98 = pneg %p92
      %p99 = scmp.eq.s32.totalorder %s15, 1
      %p100 = por %p98, %p99
      %p101 = scmp.ne.s32.totalorder %s93, %s96
      %p102 = scmp.eq.s32.totalorder %s15, 0
      %p103 = por %p101, %p102
      %p104 = scmp.ne.s32.totalorder %s93, %s96
      %p105 = scmp.eq.s32.totalorder %s20, 1
      %p106 = por %p104, %p105
      %p107 = scmp.ne.s32.totalorder %s96, %s97
      %p108 = scmp.eq.s32.totalorder %s20, 0
      %p109 = por %p107, %p108
      %p110 = scmp.ne.s32.totalorder %s96, %s97
      %p111 = scmp.eq.s32.totalorder %s21, 1
      %p112 = por %p110, %p111
      %p114 = scmp.ne.s32.totalorder %s97, %s113
      %p115 = scmp.eq.s32.totalorder %s21, 0
      %p116 = por %p114, %p115
      %p117 = scmp.le.s32.totalorder 1, %s15
      %p118 = scmp.lt.s32.totalorder %s15, 3
      %p119 = pnand %p117, %p118
      %p120 = pneg %p119
      // Predicated region
      $region9: #{tpu_custom_call.1} parent=5 // pred_check
        _
      $region10: #{tpu_custom_call.1} parent=5 // pred_check_branch
        %122 = sbr.rel (%p119) target = $region12
      $region11: #{tpu_custom_call.1} parent=5 // pred_region
        %s123 = ssub.s32 %s15, 1
        // Predicated region
        $region13: #{tpu_custom_call.1} parent=11 // pred_check
          %p124 = pneg %p62
        $region14: #{tpu_custom_call.1} parent=11 // pred_check_branch
          %126 = sbr.rel (%p124) target = $region16
        $region15: #{tpu_custom_call.1} parent=11 // pred_region
          _
        $region16: #{tpu_custom_call.1} parent=11 // pred_fallthru
          _
        // Predicated region
        $region17: #{tpu_custom_call.1} parent=11 // pred_check
          %p127 = pneg %p83
        $region18: #{tpu_custom_call.1} parent=11 // pred_check_branch
          %129 = sbr.rel (%p127) target = $region20
        $region19: #{tpu_custom_call.1} parent=11 // pred_region
          _
        $region20: #{tpu_custom_call.1} parent=11 // pred_fallthru
          _
      $region12: #{tpu_custom_call.1} parent=5 // pred_fallthru
        _
      %p130 = scmp.lt.s32.totalorder %s15, 2
      // Predicated region
      $region21: #{tpu_custom_call.1} parent=5 // pred_check
        %p131 = pneg %p130
      $region22: #{tpu_custom_call.1} parent=5 // pred_check_branch
        %133 = sbr.rel (%p131) target = $region24
      $region23: #{tpu_custom_call.1} parent=5 // pred_region
        // Predicated region
        $region25: #{tpu_custom_call.1} parent=23 // pred_check
          %p134 = pneg %p35
        $region26: #{tpu_custom_call.1} parent=23 // pred_check_branch
          %136 = sbr.rel (%p134) target = $region28
        $region27: #{tpu_custom_call.1} parent=23 // pred_region
          %s137 = sand.u32 %s25, 1
          %s138 = scalar_lea.sflag [#allocation3], %s137
          %s139 = sand.u32 %s25, 1
          %s140 = smul.addr %s139, 16
          %s141 = scalar_lea.vmem [#allocation2], %s140
          %s142 = smul.u32 8, %s15
          %144 = vsyncadd %s138, 0
          %s145 = smul.addr %s142, 2
          %s146 = scalar_lea.hbm %s0, %s145
          %s147 = sshll.u32 %s146, 4
          %s148 = int_to_ptr.hbm [resolvable:$true] %s147
          %s149 = sshll.u32 %s141, 4
          %s150 = int_to_ptr.vmem [resolvable:$true] %s149
          %155 = dma.hbm_to_vmem [thread:$0]  %s148, 256, %s150, %s138, 32, 32, 2
        $region28: #{tpu_custom_call.1} parent=23 // pred_fallthru
          _
      $region24: #{tpu_custom_call.1} parent=5 // pred_fallthru
        _
      %p156 = scmp.le.s32.totalorder 1, %s15
      %p157 = scmp.lt.s32.totalorder %s15, 3
      %p158 = pnand %p156, %p157
      %p159 = pneg %p158
      // Predicated region
      $region29: #{tpu_custom_call.1} parent=5 // pred_check
        _
      $region30: #{tpu_custom_call.1} parent=5 // pred_check_branch
        %161 = sbr.rel (%p158) target = $region32
      $region31: #{tpu_custom_call.1} parent=5 // pred_region
        %s162 = ssub.s32 %s15, 1
        %s163 = sand.u32 %s28, 1
        %s164 = scalar_lea.sflag [#allocation3], %s163
        %s165 = sand.u32 %s28, 1
        %s166 = smul.addr %s165, 16
        %s167 = scalar_lea.vmem [#allocation2], %s166
        // Predicated region
        $region33: #{tpu_custom_call.1} parent=31 // pred_check
          %p168 = pneg %p41
        $region34: #{tpu_custom_call.1} parent=31 // pred_check_branch
          %170 = sbr.rel (%p168) target = $region36
        $region35: #{tpu_custom_call.1} parent=31 // pred_region
          %172 = dma.done %s164, 256
        $region36: #{tpu_custom_call.1} parent=31 // pred_fallthru
          _
        %s173 = sand.u32 %s28, 1
        %s174 = scalar_lea.sflag [#allocation3], %s173
        %s175 = sand.u32 %s28, 1
        %s176 = smul.addr %s175, 16
        %s177 = scalar_lea.vmem [#allocation2], %s176
        %p178 = pneg %p41
        %p179 = pneg %p38
        %p180 = pneg %p62
        %p181 = pneg %p59
        %p182 = pneg %p83
        %p183 = pneg %p80
        %p184 = pneg %p109
        %p185 = pneg %p106
        %s186 = sand.u32 %s96, 1
        %s187 = scalar_lea.sflag [#allocation4], %s186
        %s188 = sand.u32 %s96, 1
        %s189 = smul.addr %s188, 8
        %s190 = scalar_lea.vmem [#allocation5], %s189
        %s191 = smul.u32 8, %s20
        %v193 = vld [vmem:[%s1] sm:$0xf]
        %v194 = vld [vmem:[%s1 + $0x4] sm:$0xf]
        %v195 = vld [vmem:[%s1 + $0x8] sm:$0xf]
        %v196 = vld [vmem:[%s1 + $0xc] sm:$0xf]
        %v197 = vld [vmem:[%s2] sm:$0x1]
        %v198 = vld [vmem:[%s167] sm:$0x1]
        %v199 = vld [vmem:[%s167 + $0x2] sm:$0x1]
        %v200 = vld [vmem:[%s167 + $0x4] sm:$0x1]
        %v201 = vld [vmem:[%s167 + $0x6] sm:$0x1]
        %v202 = vld [vmem:[%s167 + $0x8] sm:$0x1]
        %v203 = vld [vmem:[%s167 + $0xa] sm:$0x1]
        %v204 = vld [vmem:[%s167 + $0xc] sm:$0x1]
        %v205 = vld [vmem:[%s167 + $0xe] sm:$0x1]
        %207 = vst [vmem:[#allocation1] ss:$4 sm:$0xff] %v198
        %v208 = vld.sshfl [vmem:[#allocation1] sm:$0xff pattern:$0x73625140]
        %s211 = scalar_lea.vmem [#allocation1], 32
        %212 = vst [vmem:[%s211] ss:$4 sm:$0xff] %v199
        %v213 = vld.sshfl [vmem:[#allocation1 + $0x20] sm:$0xff pattern:$0x73625140]
        %216 = vst [vmem:[#allocation1] ss:$4 sm:$0xff] %v200
        %v217 = vld.sshfl [vmem:[#allocation1] sm:$0xff pattern:$0x73625140]
        %220 = vst [vmem:[%s211] ss:$4 sm:$0xff] %v201
        %v221 = vld.sshfl [vmem:[#allocation1 + $0x20] sm:$0xff pattern:$0x73625140]
        %224 = vst [vmem:[#allocation1] ss:$4 sm:$0xff] %v202
        %v225 = vld.sshfl [vmem:[#allocation1] sm:$0xff pattern:$0x73625140]
        %228 = vst [vmem:[%s211] ss:$4 sm:$0xff] %v203
        %v229 = vld.sshfl [vmem:[#allocation1 + $0x20] sm:$0xff pattern:$0x73625140]
        %232 = vst [vmem:[#allocation1] ss:$4 sm:$0xff] %v204
        %v233 = vld.sshfl [vmem:[#allocation1] sm:$0xff pattern:$0x73625140]
        %236 = vst [vmem:[%s211] ss:$4 sm:$0xff] %v205
        %v237 = vld.sshfl [vmem:[#allocation1 + $0x20] sm:$0xff pattern:$0x73625140]
        %v239 = vunpack.c.l.b16 %v208
        %v240 = vunpack.c.l.b16 %v213
        %v241 = vunpack.c.l.b16 %v217
        %v242 = vunpack.c.l.b16 %v221
        %v243 = vunpack.c.l.b16 %v225
        %v244 = vunpack.c.l.b16 %v229
        %v245 = vunpack.c.l.b16 %v233
        %v246 = vunpack.c.l.b16 %v237
        %v247 = vrot.slane %v240, 7
        %vm248 = vcmask 1041409
        %v249 = vsel %vm248, %v247, %v239
        %v250 = vrot.slane %v241, 6
        %vm251 = vcmask 1042434
        %v252 = vsel %vm251, %v250, %v249
        %v253 = vrot.slane %v242, 5
        %vm254 = vcmask 1043459
        %v255 = vsel %vm254, %v253, %v252
        %v256 = vrot.slane %v243, 4
        %vm257 = vcmask 1044484
        %v258 = vsel %vm257, %v256, %v255
        %v259 = vrot.slane %v244, 3
        %vm260 = vcmask 1045509
        %v261 = vsel %vm260, %v259, %v258
        %v262 = vrot.slane %v245, 2
        %vm263 = vcmask 1046534
        %v264 = vsel %vm263, %v262, %v261
        %v265 = vrot.slane %v246, 1
        %vm266 = vcmask 1047559
        %v267 = vsel %vm266, %v265, %v264
        %v268 = vpack.c.b16 %v267, %v267
        %v273 = vunpack.c.l.b16 %v193
        %v274 = vunpack.c.l.b16 %v194
        %v275 = vunpack.c.l.b16 %v195
        %v276 = vunpack.c.l.b16 %v196
        %v277 = vpack.c.b16 %v274, %v273
        %v278 = vpack.c.b16 %v276, %v275
        %vm281 = vcmask 261120
        %v283 = vsel %vm281, %v268, 0
        %285 = vmatpush.bf16.msra.mxu0 0
        %286 = vmatpush.bf16.msra.mxu0 0
        %287 = vmatpush.bf16.msra.mxu0 0
        %288 = vmatpush.bf16.msra.mxu0 0
        %289 = vmatpush.bf16.msra.mxu0 0
        %290 = vmatpush.bf16.msra.mxu0 0
        %291 = vmatpush.bf16.msra.mxu0 %v278
        %292 = vmatpush.bf16.msra.mxu0 %v277
        %293 = vmatmul.bf16.gmra.mxu0 %v283
        %v294 = vpop.f32.mrf.mxu0
        %v295 = vadd.f32 0.0, %v294
        %v296 = vpop.f32.mrf.mxu0
        %297 = vdwg.mxu0
        %v298 = vadd.f32 %v295, 0.0
        %v299 = vld [vmem:[%s167] sm:$0x1]
        %v300 = vld [vmem:[%s167 + $0x2] sm:$0x1]
        %v301 = vld [vmem:[%s167 + $0x4] sm:$0x1]
        %v302 = vld [vmem:[%s167 + $0x6] sm:$0x1]
        %v303 = vld [vmem:[%s167 + $0x8] sm:$0x1]
        %v304 = vld [vmem:[%s167 + $0xa] sm:$0x1]
        %v305 = vld [vmem:[%s167 + $0xc] sm:$0x1]
        %v306 = vld [vmem:[%s167 + $0xe] sm:$0x1]
        %308 = vst [vmem:[#allocation1] ss:$4 sm:$0xff] %v299
        %v309 = vld.sshfl [vmem:[#allocation1] sm:$0xff pattern:$0x73625140]
        %s312 = scalar_lea.vmem [#allocation1], 32
        %313 = vst [vmem:[%s312] ss:$4 sm:$0xff] %v300
        %v314 = vld.sshfl [vmem:[#allocation1 + $0x20] sm:$0xff pattern:$0x73625140]
        %317 = vst [vmem:[#allocation1] ss:$4 sm:$0xff] %v301
        %v318 = vld.sshfl [vmem:[#allocation1] sm:$0xff pattern:$0x73625140]
        %321 = vst [vmem:[%s312] ss:$4 sm:$0xff] %v302
        %v322 = vld.sshfl [vmem:[#allocation1 + $0x20] sm:$0xff pattern:$0x73625140]
        %325 = vst [vmem:[#allocation1] ss:$4 sm:$0xff] %v303
        %v326 = vld.sshfl [vmem:[#allocation1] sm:$0xff pattern:$0x73625140]
        %329 = vst [vmem:[%s312] ss:$4 sm:$0xff] %v304
        %v330 = vld.sshfl [vmem:[#allocation1 + $0x20] sm:$0xff pattern:$0x73625140]
        %333 = vst [vmem:[#allocation1] ss:$4 sm:$0xff] %v305
        %v334 = vld.sshfl [vmem:[#allocation1] sm:$0xff pattern:$0x73625140]
        %337 = vst [vmem:[%s312] ss:$4 sm:$0xff] %v306
        %v338 = vld.sshfl [vmem:[#allocation1 + $0x20] sm:$0xff pattern:$0x73625140]
        %v340 = vunpack.c.l.b16 %v309
        %v341 = vunpack.c.l.b16 %v314
        %v342 = vunpack.c.l.b16 %v318
        %v343 = vunpack.c.l.b16 %v322
        %v344 = vunpack.c.l.b16 %v326
        %v345 = vunpack.c.l.b16 %v330
        %v346 = vunpack.c.l.b16 %v334
        %v347 = vunpack.c.l.b16 %v338
        %v348 = vrot.slane %v340, 1
        %v349 = vsel %vm248, %v341, %v348
        %v350 = vrot.slane %v342, 7
        %v351 = vsel %vm251, %v350, %v349
        %v352 = vrot.slane %v343, 6
        %v353 = vsel %vm254, %v352, %v351
        %v354 = vrot.slane %v344, 5
        %v355 = vsel %vm257, %v354, %v353
        %v356 = vrot.slane %v345, 4
        %v357 = vsel %vm260, %v356, %v355
        %v358 = vrot.slane %v346, 3
        %v359 = vsel %vm263, %v358, %v357
        %v360 = vrot.slane %v347, 2
        %v361 = vsel %vm266, %v360, %v359
        %v362 = vpack.c.b16 %v361, %v361
        %v364 = vsel %vm281, %v362, 0
        %366 = vmatpush.bf16.msra.mxu0 0
        %367 = vmatpush.bf16.msra.mxu0 0
        %368 = vmatpush.bf16.msra.mxu0 0
        %369 = vmatpush.bf16.msra.mxu0 0
        %370 = vmatpush.bf16.msra.mxu0 0
        %371 = vmatpush.bf16.msra.mxu0 0
        %372 = vmatpush.bf16.msra.mxu0 %v278
        %373 = vmatpush.bf16.msra.mxu0 %v277
        %374 = vmatmul.bf16.gmra.mxu0 %v364
        %v375 = vpop.f32.mrf.mxu0
        %v376 = vadd.f32 0.0, %v375
        %v377 = vpop.f32.mrf.mxu0
        %378 = vdwg.mxu0
        %v379 = vadd.f32 %v298, %v376
        %v380 = vmin.f32 %v295, %v376
        %v381 = vld [vmem:[%s167] sm:$0x2]
        %v382 = vld [vmem:[%s167 + $0x2] sm:$0x2]
        %v383 = vld [vmem:[%s167 + $0x4] sm:$0x2]
        %v384 = vld [vmem:[%s167 + $0x6] sm:$0x2]
        %v385 = vld [vmem:[%s167 + $0x8] sm:$0x2]
        %v386 = vld [vmem:[%s167 + $0xa] sm:$0x2]
        %v387 = vld [vmem:[%s167 + $0xc] sm:$0x2]
        %v388 = vld [vmem:[%s167 + $0xe] sm:$0x2]
        %390 = vst [vmem:[#allocation1] ss:$4 sm:$0xff] %v381
        %v391 = vld.sshfl [vmem:[#allocation1] sm:$0xff pattern:$0x73625140]
        %s394 = scalar_lea.vmem [#allocation1], 32
        %395 = vst [vmem:[%s394] ss:$4 sm:$0xff] %v382
        %v396 = vld.sshfl [vmem:[#allocation1 + $0x20] sm:$0xff pattern:$0x73625140]
        %399 = vst [vmem:[#allocation1] ss:$4 sm:$0xff] %v383
        %v400 = vld.sshfl [vmem:[#allocation1] sm:$0xff pattern:$0x73625140]
        %403 = vst [vmem:[%s394] ss:$4 sm:$0xff] %v384
        %v404 = vld.sshfl [vmem:[#allocation1 + $0x20] sm:$0xff pattern:$0x73625140]
        %407 = vst [vmem:[#allocation1] ss:$4 sm:$0xff] %v385
        %v408 = vld.sshfl [vmem:[#allocation1] sm:$0xff pattern:$0x73625140]
        %411 = vst [vmem:[%s394] ss:$4 sm:$0xff] %v386
        %v412 = vld.sshfl [vmem:[#allocation1 + $0x20] sm:$0xff pattern:$0x73625140]
        %415 = vst [vmem:[#allocation1] ss:$4 sm:$0xff] %v387
        %v416 = vld.sshfl [vmem:[#allocation1] sm:$0xff pattern:$0x73625140]
        %419 = vst [vmem:[%s394] ss:$4 sm:$0xff] %v388
        %v420 = vld.sshfl [vmem:[#allocation1 + $0x20] sm:$0xff pattern:$0x73625140]
        %v422 = vunpack.c.l.b16 %v391
        %v423 = vunpack.c.l.b16 %v396
        %v424 = vunpack.c.l.b16 %v400
        %v425 = vunpack.c.l.b16 %v404
        %v426 = vunpack.c.l.b16 %v408
        %v427 = vunpack.c.l.b16 %v412
        %v428 = vunpack.c.l.b16 %v416
        %v429 = vunpack.c.l.b16 %v420
        %v430 = vrot.slane %v422, 2
        %v431 = vrot.slane %v423, 1
        %v432 = vsel %vm248, %v431, %v430
        %v433 = vsel %vm251, %v424, %v432
        %v434 = vrot.slane %v425, 7
        %v435 = vsel %vm254, %v434, %v433
        %v436 = vrot.slane %v426, 6
        %v437 = vsel %vm257, %v436, %v435
        %v438 = vrot.slane %v427, 5
        %v439 = vsel %vm260, %v438, %v437
        %v440 = vrot.slane %v428, 4
        %v441 = vsel %vm263, %v440, %v439
        %v442 = vrot.slane %v429, 3
        %v443 = vsel %vm266, %v442, %v441
        %v444 = vpack.c.b16 %v443, %v443
        %v446 = vsel %vm281, %v444, 0
        %448 = vmatpush.bf16.msra.mxu0 0
        %449 = vmatpush.bf16.msra.mxu0 0
        %450 = vmatpush.bf16.msra.mxu0 0
        %451 = vmatpush.bf16.msra.mxu0 0
        %452 = vmatpush.bf16.msra.mxu0 0
        %453 = vmatpush.bf16.msra.mxu0 0
        %454 = vmatpush.bf16.msra.mxu0 %v278
        %455 = vmatpush.bf16.msra.mxu0 %v277
        %456 = vmatmul.bf16.gmra.mxu0 %v446
        %v457 = vpop.f32.mrf.mxu0
        %v458 = vadd.f32 0.0, %v457
        %v459 = vpop.f32.mrf.mxu0
        %460 = vdwg.mxu0
        %v461 = vadd.f32 %v458, 0.0
        %v462 = vmin.f32 %v380, %v458
        %v463 = vld [vmem:[%s167] sm:$0x2]
        %v464 = vld [vmem:[%s167 + $0x2] sm:$0x2]
        %v465 = vld [vmem:[%s167 + $0x4] sm:$0x2]
        %v466 = vld [vmem:[%s167 + $0x6] sm:$0x2]
        %v467 = vld [vmem:[%s167 + $0x8] sm:$0x2]
        %v468 = vld [vmem:[%s167 + $0xa] sm:$0x2]
        %v469 = vld [vmem:[%s167 + $0xc] sm:$0x2]
        %v470 = vld [vmem:[%s167 + $0xe] sm:$0x2]
        %472 = vst [vmem:[#allocation1] ss:$4 sm:$0xff] %v463
        %v473 = vld.sshfl [vmem:[#allocation1] sm:$0xff pattern:$0x73625140]
        %s476 = scalar_lea.vmem [#allocation1], 32
        %477 = vst [vmem:[%s476] ss:$4 sm:$0xff] %v464
        %v478 = vld.sshfl [vmem:[#allocation1 + $0x20] sm:$0xff pattern:$0x73625140]
        %481 = vst [vmem:[#allocation1] ss:$4 sm:$0xff] %v465
        %v482 = vld.sshfl [vmem:[#allocation1] sm:$0xff pattern:$0x73625140]
        %485 = vst [vmem:[%s476] ss:$4 sm:$0xff] %v466
        %v486 = vld.sshfl [vmem:[#allocation1 + $0x20] sm:$0xff pattern:$0x73625140]
        %489 = vst [vmem:[#allocation1] ss:$4 sm:$0xff] %v467
        %v490 = vld.sshfl [vmem:[#allocation1] sm:$0xff pattern:$0x73625140]
        %493 = vst [vmem:[%s476] ss:$4 sm:$0xff] %v468
        %v494 = vld.sshfl [vmem:[#allocation1 + $0x20] sm:$0xff pattern:$0x73625140]
        %497 = vst [vmem:[#allocation1] ss:$4 sm:$0xff] %v469
        %v498 = vld.sshfl [vmem:[#allocation1] sm:$0xff pattern:$0x73625140]
        %501 = vst [vmem:[%s476] ss:$4 sm:$0xff] %v470
        %v502 = vld.sshfl [vmem:[#allocation1 + $0x20] sm:$0xff pattern:$0x73625140]
        %v504 = vunpack.c.l.b16 %v473
        %v505 = vunpack.c.l.b16 %v478
        %v506 = vunpack.c.l.b16 %v482
        %v507 = vunpack.c.l.b16 %v486
        %v508 = vunpack.c.l.b16 %v490
        %v509 = vunpack.c.l.b16 %v494
        %v510 = vunpack.c.l.b16 %v498
        %v511 = vunpack.c.l.b16 %v502
        %v512 = vrot.slane %v504, 3
        %v513 = vrot.slane %v505, 2
        %v514 = vsel %vm248, %v513, %v512
        %v515 = vrot.slane %v506, 1
        %v516 = vsel %vm251, %v515, %v514
        %v517 = vsel %vm254, %v507, %v516
        %v518 = vrot.slane %v508, 7
        %v519 = vsel %vm257, %v518, %v517
        %v520 = vrot.slane %v509, 6
        %v521 = vsel %vm260, %v520, %v519
        %v522 = vrot.slane %v510, 5
        %v523 = vsel %vm263, %v522, %v521
        %v524 = vrot.slane %v511, 4
        %v525 = vsel %vm266, %v524, %v523
        %v526 = vpack.c.b16 %v525, %v525
        %v528 = vsel %vm281, %v526, 0
        %530 = vmatpush.bf16.msra.mxu0 0
        %531 = vmatpush.bf16.msra.mxu0 0
        %532 = vmatpush.bf16.msra.mxu0 0
        %533 = vmatpush.bf16.msra.mxu0 0
        %534 = vmatpush.bf16.msra.mxu0 0
        %535 = vmatpush.bf16.msra.mxu0 0
        %536 = vmatpush.bf16.msra.mxu0 %v278
        %537 = vmatpush.bf16.msra.mxu0 %v277
        %538 = vmatmul.bf16.gmra.mxu0 %v528
        %v539 = vpop.f32.mrf.mxu0
        %v540 = vadd.f32 0.0, %v539
        %v541 = vpop.f32.mrf.mxu0
        %542 = vdwg.mxu0
        %v543 = vadd.f32 %v461, %v540
        %v544 = vmin.f32 %v462, %v540
        %v545 = vmul.f32 %v379, 0.5
        %v547 = vperm.slane %v197, 0
        %v549 = vadd.f32 %v545, %v547
        %v550 = vmul.f32 %v543, 0.5
        %v551 = vadd.f32 %v550, %v547
        %v552 = vadd.f32 %v544, %v547
        %554 = vrot.lane.b32.xlu0 %v549, 127
        %v555 = vpop.permute.xlu0 %554
        %vm557 = vcmask 7168
        %v558 = vsel %vm557, %v555, %v551
        %vm559 = vcmask 15360
        %v560 = vsel %vm559, %v558, %v552
        %vm561 = vcmask 23552
        %v562 = vsel %vm561, %v560, 0.0
        %563 = vst [vmem:[%s190] sm:$0xff] %v562
        %s564 = sand.u32 %s96, 1
        %s565 = scalar_lea.sflag [#allocation4], %s564
        %s566 = sand.u32 %s96, 1
        %s567 = smul.addr %s566, 8
        %s568 = scalar_lea.vmem [#allocation5], %s567
        // Predicated region
        $region37: #{tpu_custom_call.1} parent=31 // pred_check
          %p569 = pneg %p106
        $region38: #{tpu_custom_call.1} parent=31 // pred_check_branch
          %571 = sbr.rel (%p569) target = $region40
        $region39: #{tpu_custom_call.1} parent=31 // pred_region
          %573 = vsyncadd %s565, 0
          %s574 = smul.addr %s20, 8
          %s575 = scalar_lea.hbm %s3, %s574
          %s577 = sshll.u32 %s568, 4
          %s578 = int_to_ptr.vmem [resolvable:$true] %s577
          %s579 = sshll.u32 %s575, 4
          %s580 = int_to_ptr.hbm [resolvable:$true] %s579
          %582 = dma.vmem_to_hbm [thread:$0]  %s578, 128, %s580, %s565
        $region40: #{tpu_custom_call.1} parent=31 // pred_fallthru
          _
      $region32: #{tpu_custom_call.1} parent=5 // pred_fallthru
        _
      %p583 = scmp.le.s32.totalorder 2, %s15
      // Predicated region
      $region41: #{tpu_custom_call.1} parent=5 // pred_check
        %p584 = pneg %p583
      $region42: #{tpu_custom_call.1} parent=5 // pred_check_branch
        %586 = sbr.rel (%p584) target = $region44
      $region43: #{tpu_custom_call.1} parent=5 // pred_region
        %s587 = ssub.s32 %s15, 2
        // Predicated region
        $region45: #{tpu_custom_call.1} parent=43 // pred_check
          %p588 = pneg %p112
        $region46: #{tpu_custom_call.1} parent=43 // pred_check_branch
          %590 = sbr.rel (%p588) target = $region48
        $region47: #{tpu_custom_call.1} parent=43 // pred_region
          %s591 = sand.u32 %s97, 1
          %s592 = scalar_lea.sflag [#allocation4], %s591
          %s593 = sand.u32 %s97, 1
          %s594 = smul.addr %s593, 8
          %s595 = scalar_lea.vmem [#allocation5], %s594
          %597 = dma.done %s592, 128
        $region48: #{tpu_custom_call.1} parent=43 // pred_fallthru
          _
      $region44: #{tpu_custom_call.1} parent=5 // pred_fallthru
        _
    $region6: #{tpu_custom_call.1} parent=1 // loop_footer
      %s19 = sadd.s32 1, %s15
    $region7: #{tpu_custom_call.1} parent=1 // loop_footer_branch
      %14 = sbr.rel target = $region3
    $region8: #{tpu_custom_call.1} parent=1 // loop_exit
      _
    %598 = vsyncpa [#allocation3], 1
    %s599 = scalar_lea.sflag [#allocation3], 1
    %600 = vsyncpa %s599, 1
    %601 = vsyncpa [#allocation4], 1
    %s602 = scalar_lea.sflag [#allocation4], 1
    %603 = vsyncpa %s602, 1

</llo_original>
